<compile_context>
chip_gen: v7x
topology: tpu7x:2x2x1
jax: 0.10.0
libtpu: 0.0.40
codegen_flags: <defaults>
</compile_context>

<pallas_src>
import functools

import jax
import jax.numpy as jnp
from jax.experimental import pallas as pl
from jax.experimental.pallas import tpu as pltpu

LANE = 128  # padded hidden-feature width (one full vreg lane dimension)


def _round_up(n, m):
    return ((n + m - 1) // m) * m


# ---------------------------------------------------------------------------
# Fused kernel: the entire MLP stack for one batch tile, entirely in VMEM.
# Layers are a static (unrolled) Python loop: each is one MXU matmul + VPU
# bias add + EUP tanh/gelu, overlapping in different VLIW slots.
# ---------------------------------------------------------------------------
def _apply_act(h, act):
    if act == "tanh":
        return jnp.tanh(h)
    if act == "gelu":
        return jax.nn.gelu(h)  # tanh approximation (see TODO above)
    if act == "relu":
        return jnp.maximum(h, 0.0)
    if act == "identity":
        return h
    raise ValueError(f"unknown activation {act!r}")


def _fused_mlp_kernel(x_ref, w0_ref, w_rest_ref, b_ref, o_ref, *, act_names):
    # Layer 0 consumes the un-padded (tile_b, d_in) input tile directly.
    h = x_ref[...]                                          # (TB, d_in) f32
    w0 = w0_ref[...].astype(jnp.float32)                    # (d_in, 128)
    h = jnp.dot(h, w0, preferred_element_type=jnp.float32)
    h = h + b_ref[0].astype(jnp.float32)                    # (1, 128) broadcast
    h = _apply_act(h, act_names[0])

    # Layers 1..L-1: 128x128 resident weight slabs, static trip count.
    for l in range(1, len(act_names)):
        w = w_rest_ref[l - 1].astype(jnp.float32)            # (128, 128), static idx
        h = jnp.dot(h, w, preferred_element_type=jnp.float32)
        h = h + b_ref[l].astype(jnp.float32)
        h = _apply_act(h, act_names[l])

    o_ref[...] = h.astype(o_ref.dtype)                       # lane-dense (TB, 128)


# ---------------------------------------------------------------------------
# Parameter setup (one-time glue, outside the hot path).
# ---------------------------------------------------------------------------
def init_mlp_params(key, hidden_layers):
    """Deterministic init mimicking nn.Linear default (uniform +-1/sqrt(fan_in)).
    Weights stored in PyTorch layout (out, in), exactly like the module."""
    params = []
    for i in range(1, len(hidden_layers)):
        fan_in, fan_out = hidden_layers[i - 1], hidden_layers[i]
        key, kw, kb = jax.random.split(key, 3)
        bound = 1.0 / float(fan_in) ** 0.5
        w = jax.random.uniform(kw, (fan_out, fan_in), jnp.float32, -bound, bound)
        b = jax.random.uniform(kb, (fan_out,), jnp.float32, -bound, bound)
        params.append((w, b))
    return params


def pack_params(params, activations, pad=LANE, dtype=jnp.bfloat16):
    """Pre-transpose to (in, out), zero-pad hidden widths to `pad` lanes.

    Returns:
      w0      : (d_in, pad)        layer-0 weight at its real input width
      w_rest  : (max(L-1,1), pad, pad)  remaining layers, stacked
      b_stack : (L, 1, pad)        all biases

    Zero padding is exact: padded weight rows/cols and bias lanes are 0 and
    every supported activation maps 0 -> 0, so padded lanes stay 0 through
    the whole stack (and are multiplied by zero weight rows anyway).
    """
    L = len(params)
    assert L >= 1
    for act in activations:
        assert act in ("tanh", "gelu", "relu", "identity"), (
            f"activation {act!r}: padding trick requires act(0) == 0")
    for w, _ in params:
        assert w.shape[0] <= pad, "hidden widths must fit in one 128-lane slab"

    w0_t, b0 = params[0]
    dout0, din = w0_t.shape
    w0 = jnp.zeros((din, pad), jnp.float32).at[:, :dout0].set(
        jnp.transpose(w0_t).astype(jnp.float32))

    n_rest = max(L - 1, 1)                       # dummy (unused) slab if L == 1
    w_rest = jnp.zeros((n_rest, pad, pad), jnp.float32)
    b_stack = jnp.zeros((L, 1, pad), jnp.float32)
    b_stack = b_stack.at[0, 0, :dout0].set(b0.astype(jnp.float32))
    for l in range(1, L):
        w, b = params[l]
        dout, d_in = w.shape
        w_rest = w_rest.at[l - 1, :d_in, :dout].set(
            jnp.transpose(w).astype(jnp.float32))
        b_stack = b_stack.at[l, 0, :dout].set(b.astype(jnp.float32))

    # bf16 storage: the MXU consumes bf16 operands under default precision, so
    # f32 storage would only double weight DMA / resident VMEM.
    return w0.astype(dtype), w_rest.astype(dtype), b_stack.astype(dtype)


def pick_tile_b(batch):
    """Batch tile: single step for tiny batches, otherwise >=2 tiles (v7x has
    2 TensorCores) with tile_b a multiple of 8, capped at 512 rows."""
    b8 = _round_up(max(batch, 1), 8)
    if b8 <= 8:
        return 8
    return min(512, _round_up(pl.cdiv(b8, 2), 8))


def _resident_spec(block_shape):
    """Grid-invariant block (weights/biases): request single buffering."""
    idx = lambda i: (0,) * len(block_shape)
    try:
        return pl.BlockSpec(block_shape, idx, pipeline_mode=pl.Buffered(1))
    except (TypeError, AttributeError):   # older jax without pipeline_mode
        return pl.BlockSpec(block_shape, idx)


# ---------------------------------------------------------------------------
# Jitted forward: (optional) batch pad, single fused pallas_call, slice result.
# ---------------------------------------------------------------------------
@functools.partial(jax.jit, static_argnames=("act_names", "out_dim", "tile_b"))
def mlp_forward(x, w0, w_rest, b_stack, *, act_names, out_dim, tile_b):
    B, din = x.shape
    P = w0.shape[1]
    n_tiles = pl.cdiv(B, tile_b)
    b_pad = n_tiles * tile_b

    x32 = x.astype(jnp.float32)
    if b_pad != B:
        # fused pad of the ragged last tile; no zero-slab + copy round trip
        x32 = jnp.pad(x32, ((0, b_pad - B), (0, 0)))

    kernel = functools.partial(_fused_mlp_kernel, act_names=act_names)
    out_pad = pl.pallas_call(
        kernel,
        out_shape=jax.ShapeDtypeStruct((b_pad, P), jnp.float32),
        grid_spec=pltpu.PrefetchScalarGridSpec(
            num_scalar_prefetch=0,
            grid=(n_tiles,),
            in_specs=[
                pl.BlockSpec((tile_b, din), lambda i: (i, 0)),  # un-padded input tile
                _resident_spec(w0.shape),                       # (din, 128)
                _resident_spec(w_rest.shape),                   # (L-1, 128, 128)
                _resident_spec(b_stack.shape),                  # (L, 1, 128)
            ],
            out_specs=pl.BlockSpec((tile_b, P), lambda i: (i, 0)),
        ),
        compiler_params=pltpu.CompilerParams(
            dimension_semantics=("parallel",),   # shard batch tiles across TCs
        ),
    )(x32, w0, w_rest, b_stack)

    return out_pad[:B, :out_dim]


# ---------------------------------------------------------------------------
# Pure-JAX reference (un-padded f32 params) for correctness checking.
# ---------------------------------------------------------------------------
def mlp_reference(params, activations, x):
    h = x
    for (w, b), act in zip(params, activations):
        h = h @ w.T + b
        h = _apply_act(h, act)
    return h


if __name__ == "__main__":
    # Small MLP consistent with MLPModel(__init__):
    #   hidden_layers = [16, 64, 64, 32], layers_type = ['dense']*3,
    #   activations   = [GELU, Tanh, Tanh]
    hidden_layers = [16, 64, 64, 32]
    activations = ("gelu", "tanh", "tanh")
    batch = 20   # pads to 2 tiles of 16 rows -> exercises the parallel grid

    key = jax.random.PRNGKey(0)
    key, kx = jax.random.split(key)
    x = jax.random.normal(kx, (batch, hidden_layers[0]), jnp.float32)

    params = init_mlp_params(key, hidden_layers)
    w0, w_rest, b_stack = pack_params(params, activations)   # one-time pack

    tile_b = pick_tile_b(batch)
    out = mlp_forward(x, w0, w_rest, b_stack,
                      act_names=activations,
                      out_dim=hidden_layers[-1],
                      tile_b=tile_b)
    out = jax.block_until_ready(out)

    ref = mlp_reference(params, activations, x)
    assert out.shape == (batch, hidden_layers[-1])
    # bf16-stored weights + default (bf16) MXU precision vs f32 reference:
    # expected mismatch ~1e-3; tolerance set accordingly.
    assert jnp.allclose(out, ref, atol=2e-2, rtol=2e-2), "mismatch vs JAX reference"

    print("KERNEL_OK")
</pallas_src>

<mosaic_0001>
module attributes {stable_mosaic.version = 11 : i64} {
  func.func @_fused_mlp_kernel(%arg0: i32, %arg1: memref<16x16xf32, #tpu.memory_space<vmem>>, %arg2: memref<16x128xbf16, #tpu.memory_space<vmem>>, %arg3: memref<2x128x128xbf16, #tpu.memory_space<vmem>>, %arg4: memref<3x1x128xbf16, #tpu.memory_space<vmem>>, %arg5: memref<16x128xf32, #tpu.memory_space<vmem>>) attributes {dimension_semantics = [#tpu.dimension_semantics<parallel>], iteration_bounds = array<i64: 2>, scalar_prefetch = 0 : i64, scratch_operands = 0 : i64, tpu.core_type = #tpu.core_type<tc>, window_params = [{transform_indices = @transform_0, window_bounds = array<i64: 16, 16>}, {pipeline_mode = #tpu.pipeline_mode<synchronous>, transform_indices = @transform_1, window_bounds = array<i64: 16, 128>}, {pipeline_mode = #tpu.pipeline_mode<synchronous>, transform_indices = @transform_2, window_bounds = array<i64: 2, 128, 128>}, {pipeline_mode = #tpu.pipeline_mode<synchronous>, transform_indices = @transform_3, window_bounds = array<i64: 3, 1, 128>}, {transform_indices = @transform_4, window_bounds = array<i64: 16, 128>}]} {
    %c0 = arith.constant 0 : index
    %c0_0 = arith.constant 0 : index
    %0 = vector.load %arg1[%c0, %c0_0] : memref<16x16xf32, #tpu.memory_space<vmem>>, vector<16x16xf32>
    %c0_1 = arith.constant 0 : index
    %c0_2 = arith.constant 0 : index
    %1 = vector.load %arg2[%c0_1, %c0_2] : memref<16x128xbf16, #tpu.memory_space<vmem>>, vector<16x128xbf16>
    %2 = arith.extf %1 : vector<16x128xbf16> to vector<16x128xf32>
    %cst = arith.constant dense<0.000000e+00> : vector<16x128xf32>
    %3 = tpu.matmul %0, %2, %cst {dimension_numbers = #tpu.dot_dimension_numbers<[1], [0], [0], [1], [0, 0, 1, 1], [], []>} : vector<16x16xf32>, vector<16x128xf32>, vector<16x128xf32> -> vector<16x128xf32>
    %c0_3 = arith.constant 0 : index
    %c0_4 = arith.constant 0 : index
    %c0_5 = arith.constant 0 : index
    %4 = vector.load %arg4[%c0_3, %c0_4, %c0_5] : memref<3x1x128xbf16, #tpu.memory_space<vmem>>, vector<1x1x128xbf16>
    %5 = vector.shape_cast %4 : vector<1x1x128xbf16> to vector<1x128xbf16>
    %6 = arith.extf %5 : vector<1x128xbf16> to vector<1x128xf32>
    %7 = vector.broadcast %6 : vector<1x128xf32> to vector<16x128xf32>
    %8 = arith.addf %3, %7 : vector<16x128xf32>
    %9 = arith.mulf %8, %8 : vector<16x128xf32>
    %10 = arith.mulf %8, %9 : vector<16x128xf32>
    %cst_6 = arith.constant 4.471500e-02 : f32
    %11 = vector.broadcast %cst_6 : f32 to vector<16x128xf32>
    %12 = arith.mulf %11, %10 : vector<16x128xf32>
    %13 = arith.addf %8, %12 : vector<16x128xf32>
    %cst_7 = arith.constant 0.797884583 : f32
    %14 = vector.broadcast %cst_7 : f32 to vector<16x128xf32>
    %15 = arith.mulf %14, %13 : vector<16x128xf32>
    %16 = math.tanh %15 : vector<16x128xf32>
    %cst_8 = arith.constant 1.000000e+00 : f32
    %17 = vector.broadcast %cst_8 : f32 to vector<16x128xf32>
    %18 = arith.addf %17, %16 : vector<16x128xf32>
    %cst_9 = arith.constant 5.000000e-01 : f32
    %19 = vector.broadcast %cst_9 : f32 to vector<16x128xf32>
    %20 = arith.mulf %19, %18 : vector<16x128xf32>
    %21 = arith.mulf %8, %20 : vector<16x128xf32>
    %c0_10 = arith.constant 0 : index
    %c0_11 = arith.constant 0 : index
    %c0_12 = arith.constant 0 : index
    %22 = vector.load %arg3[%c0_10, %c0_11, %c0_12] : memref<2x128x128xbf16, #tpu.memory_space<vmem>>, vector<1x128x128xbf16>
    %23 = vector.shape_cast %22 : vector<1x128x128xbf16> to vector<128x128xbf16>
    %24 = arith.extf %23 : vector<128x128xbf16> to vector<128x128xf32>
    %cst_13 = arith.constant dense<0.000000e+00> : vector<16x128xf32>
    %25 = tpu.matmul %21, %24, %cst_13 {dimension_numbers = #tpu.dot_dimension_numbers<[1], [0], [0], [1], [0, 0, 1, 1], [], []>} : vector<16x128xf32>, vector<128x128xf32>, vector<16x128xf32> -> vector<16x128xf32>
    %c1 = arith.constant 1 : index
    %c0_14 = arith.constant 0 : index
    %c0_15 = arith.constant 0 : index
    %26 = vector.load %arg4[%c1, %c0_14, %c0_15] : memref<3x1x128xbf16, #tpu.memory_space<vmem>>, vector<1x1x128xbf16>
    %27 = vector.shape_cast %26 : vector<1x1x128xbf16> to vector<1x128xbf16>
    %28 = arith.extf %27 : vector<1x128xbf16> to vector<1x128xf32>
    %29 = vector.broadcast %28 : vector<1x128xf32> to vector<16x128xf32>
    %30 = arith.addf %25, %29 : vector<16x128xf32>
    %31 = math.tanh %30 : vector<16x128xf32>
    %c1_16 = arith.constant 1 : index
    %c0_17 = arith.constant 0 : index
    %c0_18 = arith.constant 0 : index
    %32 = vector.load %arg3[%c1_16, %c0_17, %c0_18] : memref<2x128x128xbf16, #tpu.memory_space<vmem>>, vector<1x128x128xbf16>
    %33 = vector.shape_cast %32 : vector<1x128x128xbf16> to vector<128x128xbf16>
    %34 = arith.extf %33 : vector<128x128xbf16> to vector<128x128xf32>
    %cst_19 = arith.constant dense<0.000000e+00> : vector<16x128xf32>
    %35 = tpu.matmul %31, %34, %cst_19 {dimension_numbers = #tpu.dot_dimension_numbers<[1], [0], [0], [1], [0, 0, 1, 1], [], []>} : vector<16x128xf32>, vector<128x128xf32>, vector<16x128xf32> -> vector<16x128xf32>
    %c2 = arith.constant 2 : index
    %c0_20 = arith.constant 0 : index
    %c0_21 = arith.constant 0 : index
    %36 = vector.load %arg4[%c2, %c0_20, %c0_21] : memref<3x1x128xbf16, #tpu.memory_space<vmem>>, vector<1x1x128xbf16>
    %37 = vector.shape_cast %36 : vector<1x1x128xbf16> to vector<1x128xbf16>
    %38 = arith.extf %37 : vector<1x128xbf16> to vector<1x128xf32>
    %39 = vector.broadcast %38 : vector<1x128xf32> to vector<16x128xf32>
    %40 = arith.addf %35, %39 : vector<16x128xf32>
    %41 = math.tanh %40 : vector<16x128xf32>
    %c0_22 = arith.constant 0 : index
    %c0_23 = arith.constant 0 : index
    %42 = vector.load %arg5[%c0_22, %c0_23] : memref<16x128xf32, #tpu.memory_space<vmem>>, vector<16x128xf32>
    tpu.vector_store %arg5[%c0_22, %c0_23], %41 {strides = array<i32>} : memref<16x128xf32, #tpu.memory_space<vmem>>, vector<16x128xf32>,
    return
  }
  func.func @transform_0(%arg0: i32) -> (i32, i32) {
    %c0_i32 = arith.constant 0 : i32
    %c0_i32_0 = arith.constant 0 : i32
    return %arg0, %c0_i32 : i32, i32
  }
  func.func @transform_1(%arg0: i32) -> (i32, i32) {
    %c0_i32 = arith.constant 0 : i32
    %c0_i32_0 = arith.constant 0 : i32
    %c0_i32_1 = arith.constant 0 : i32
    return %c0_i32, %c0_i32_0 : i32, i32
  }
  func.func @transform_2(%arg0: i32) -> (i32, i32, i32) {
    %c0_i32 = arith.constant 0 : i32
    %c0_i32_0 = arith.constant 0 : i32
    %c0_i32_1 = arith.constant 0 : i32
    %c0_i32_2 = arith.constant 0 : i32
    return %c0_i32, %c0_i32_0, %c0_i32_1 : i32, i32, i32
  }
  func.func @transform_3(%arg0: i32) -> (i32, i32, i32) {
    %c0_i32 = arith.constant 0 : i32
    %c0_i32_0 = arith.constant 0 : i32
    %c0_i32_1 = arith.constant 0 : i32
    %c0_i32_2 = arith.constant 0 : i32
    return %c0_i32, %c0_i32_0, %c0_i32_1 : i32, i32, i32
  }
  func.func @transform_4(%arg0: i32) -> (i32, i32) {
    %c0_i32 = arith.constant 0 : i32
    %c0_i32_0 = arith.constant 0 : i32
    return %arg0, %c0_i32 : i32, i32
  }
}

</mosaic_0001>

<llo_original>
// kernel: mlp_forward.1
$region0: #{mlp_forward.1}
  #allocation0 [shape = 'u32[]', space=smem, size = 0x4, offset = 0x4, fixed_abs, tag = 'smem constant byte address 0x4 - core index']
  #allocation1 [shape = 'u32[144,128]{1,0:T(1,128)}', space=vmem, size = 0x12000, scoped, tag = 'internal scratch']
  %s0 = inlined_call_operand.vmem [shape: f32[32,16], index: 0, kind: input, shape index: {}]
  %s1 = inlined_call_operand.vmem [shape: bf16[16,128], index: 1, kind: input, shape index: {}]
  %s2 = inlined_call_operand.hbm [shape: bf16[2,128,128], index: 2, kind: input, shape index: {}]
  %s3 = inlined_call_operand.vmem [shape: bf16[3,1,128], index: 3, kind: input, shape index: {}]
  %s4 = inlined_call_operand.vmem [shape: f32[32,128], index: 4, kind: output, shape index: {}]
  %s5 = sld [smem:[#allocation0]]
  $region53: #{mlp_forward.1} parent=0
    _
  %s7 = ssub.s32 1, %s5
  %s8 = scalar_select 0, %s7, %s5
  $region1: #{mlp_forward.1} parent=0
    #allocation2 [shape = 'u8[65536]{0}', space=vmem, size = 0x10000, scoped, tag = 'input window, operand 2, single buffered']
    #allocation3 [shape = 's32[2]{0}', space=sflag, size = 0x8, scoped, tag = 'scoped memory for mlp_forward.1']
    %9 = vsyncpa [#allocation3], 0
    loop: start=0, step=1, limit=4
    $region2: #{mlp_forward.1} parent=1 // loop_pre_header
      _
    $region3: #{mlp_forward.1} parent=1 // loop_header
      %s11 = sphi 0, %s15
      %p12 = scmp.ge.s32.totalorder %s11, 4
      %s21 = sphi 0, %s23
      %s24 = sphi 0, %s21
      %s25 = sphi 0, %s24
      %s41 = sphi 0, %s25
      %s45 = sphi 0, %s45
      %s47 = sphi 0, %s45
      %s48 = sphi 0, %s47
      %s62 = sphi 0, %s48
      %s66 = sphi 0, %s66
      %s68 = sphi 0, %s66
      %s69 = sphi 0, %s68
      %s83 = sphi 0, %s69
      %s87 = sphi 0, %s87
      %s89 = sphi 0, %s87
      %s90 = sphi 0, %s89
      %s104 = sphi 0, %s90
      %s110 = sphi 0, %s112
      %s113 = sphi 0, %s110
      %s114 = sphi 0, %s113
      %s130 = sphi 0, %s114
    $region4: #{mlp_forward.1} parent=1 // loop_header_branch
      %14 = sbr.rel (%p12) target = $region8
    $region5: #{mlp_forward.1} parent=1 // loop_body
      %s16 = ssub.s32 %s11, 1
      %s17 = ssub.s32 %s11, 2
      %s18 = sadd.s32 %s11, 1
      %s19 = ssub.s32 %s11, %s18
      %p20 = scmp.eq.s32.totalorder %s19, 0
      %s22 = sadd.s32 %s21, 1
      %s23 = scalar_select %p20, %s21, %s22
      %p26 = pneg %p20
      %p27 = scmp.eq.s32.totalorder %s11, 1
      %p28 = por %p26, %p27
      %p29 = scmp.ne.s32.totalorder %s21, %s24
      %p30 = scmp.eq.s32.totalorder %s11, 0
      %p31 = por %p29, %p30
      %p32 = scmp.ne.s32.totalorder %s21, %s24
      %p33 = scmp.eq.s32.totalorder %s16, 1
      %p34 = por %p32, %p33
      %p35 = scmp.ne.s32.totalorder %s24, %s25
      %p36 = scmp.eq.s32.totalorder %s16, 0
      %p37 = por %p35, %p36
      %p38 = scmp.ne.s32.totalorder %s24, %s25
      %p39 = scmp.eq.s32.totalorder %s17, 1
      %p40 = por %p38, %p39
      %p42 = scmp.ne.s32.totalorder %s25, %s41
      %p43 = scmp.eq.s32.totalorder %s17, 0
      %p44 = por %p42, %p43
      %s46 = sadd.s32 %s45, 1
      %p49 = scmp.eq.s32.totalorder %s11, 1
      %p50 = scmp.ne.s32.totalorder %s45, %s47
      %p51 = scmp.eq.s32.totalorder %s11, 0
      %p52 = por %p50, %p51
      %p53 = scmp.ne.s32.totalorder %s45, %s47
      %p54 = scmp.eq.s32.totalorder %s16, 1
      %p55 = por %p53, %p54
      %p56 = scmp.ne.s32.totalorder %s47, %s48
      %p57 = scmp.eq.s32.totalorder %s16, 0
      %p58 = por %p56, %p57
      %p59 = scmp.ne.s32.totalorder %s47, %s48
      %p60 = scmp.eq.s32.totalorder %s17, 1
      %p61 = por %p59, %p60
      %p63 = scmp.ne.s32.totalorder %s48, %s62
      %p64 = scmp.eq.s32.totalorder %s17, 0
      %p65 = por %p63, %p64
      %s67 = sadd.s32 %s66, 1
      %p70 = scmp.eq.s32.totalorder %s11, 1
      %p71 = scmp.ne.s32.totalorder %s66, %s68
      %p72 = scmp.eq.s32.totalorder %s11, 0
      %p73 = por %p71, %p72
      %p74 = scmp.ne.s32.totalorder %s66, %s68
      %p75 = scmp.eq.s32.totalorder %s16, 1
      %p76 = por %p74, %p75
      %p77 = scmp.ne.s32.totalorder %s68, %s69
      %p78 = scmp.eq.s32.totalorder %s16, 0
      %p79 = por %p77, %p78
      %p80 = scmp.ne.s32.totalorder %s68, %s69
      %p81 = scmp.eq.s32.totalorder %s17, 1
      %p82 = por %p80, %p81
      %p84 = scmp.ne.s32.totalorder %s69, %s83
      %p85 = scmp.eq.s32.totalorder %s17, 0
      %p86 = por %p84, %p85
      %s88 = sadd.s32 %s87, 1
      %p91 = scmp.eq.s32.totalorder %s11, 1
      %p92 = scmp.ne.s32.totalorder %s87, %s89
      %p93 = scmp.eq.s32.totalorder %s11, 0
      %p94 = por %p92, %p93
      %p95 = scmp.ne.s32.totalorder %s87, %s89
      %p96 = scmp.eq.s32.totalorder %s16, 1
      %p97 = por %p95, %p96
      %p98 = scmp.ne.s32.totalorder %s89, %s90
      %p99 = scmp.eq.s32.totalorder %s16, 0
      %p100 = por %p98, %p99
      %p101 = scmp.ne.s32.totalorder %s89, %s90
      %p102 = scmp.eq.s32.totalorder %s17, 1
      %p103 = por %p101, %p102
      %p105 = scmp.ne.s32.totalorder %s90, %s104
      %p106 = scmp.eq.s32.totalorder %s17, 0
      %p107 = por %p105, %p106
      %s108 = ssub.s32 %s11, %s18
      %p109 = scmp.eq.s32.totalorder %s108, 0
      %s111 = sadd.s32 %s110, 1
      %s112 = scalar_select %p109, %s110, %s111
      %p115 = pneg %p109
      %p116 = scmp.eq.s32.totalorder %s11, 1
      %p117 = por %p115, %p116
      %p118 = scmp.ne.s32.totalorder %s110, %s113
      %p119 = scmp.eq.s32.totalorder %s11, 0
      %p120 = por %p118, %p119
      %p121 = scmp.ne.s32.totalorder %s110, %s113
      %p122 = scmp.eq.s32.totalorder %s16, 1
      %p123 = por %p121, %p122
      %p124 = scmp.ne.s32.totalorder %s113, %s114
      %p125 = scmp.eq.s32.totalorder %s16, 0
      %p126 = por %p124, %p125
      %p127 = scmp.ne.s32.totalorder %s113, %s114
      %p128 = scmp.eq.s32.totalorder %s17, 1
      %p129 = por %p127, %p128
      %p131 = scmp.ne.s32.totalorder %s114, %s130
      %p132 = scmp.eq.s32.totalorder %s17, 0
      %p133 = por %p131, %p132
      %p134 = scmp.le.s32.totalorder 1, %s11
      %p135 = scmp.lt.s32.totalorder %s11, 3
      %p136 = pnand %p134, %p135
      %p137 = pneg %p136
      // Predicated region
      $region9: #{mlp_forward.1} parent=5 // pred_check
        _
      $region10: #{mlp_forward.1} parent=5 // pred_check_branch
        %139 = sbr.rel (%p136) target = $region12
      $region11: #{mlp_forward.1} parent=5 // pred_region
        %s140 = ssub.s32 %s11, 1
        // Predicated region
        $region13: #{mlp_forward.1} parent=11 // pred_check
          %p141 = pneg %p58
        $region14: #{mlp_forward.1} parent=11 // pred_check_branch
          %143 = sbr.rel (%p141) target = $region16
        $region15: #{mlp_forward.1} parent=11 // pred_region
          _
        $region16: #{mlp_forward.1} parent=11 // pred_fallthru
          _
        // Predicated region
        $region17: #{mlp_forward.1} parent=11 // pred_check
          %p144 = pneg %p79
        $region18: #{mlp_forward.1} parent=11 // pred_check_branch
          %146 = sbr.rel (%p144) target = $region20
        $region19: #{mlp_forward.1} parent=11 // pred_region
          %s148 = ssub.s32 2048, 2048
          %149 = vsyncadd [#allocation3], %s148
          %s150 = sshll.u32 [#allocation2], 4
          %s151 = int_to_ptr.vmem [resolvable:$true] %s150
          %156 = dma.hbm_to_vmem [thread:$0]  %s2, 2048, %s151, [#allocation3], 64, 64, 4
        $region20: #{mlp_forward.1} parent=11 // pred_fallthru
          _
        // Predicated region
        $region21: #{mlp_forward.1} parent=11 // pred_check
          %p157 = pneg %p100
        $region22: #{mlp_forward.1} parent=11 // pred_check_branch
          %159 = sbr.rel (%p157) target = $region24
        $region23: #{mlp_forward.1} parent=11 // pred_region
          _
        $region24: #{mlp_forward.1} parent=11 // pred_fallthru
          _
      $region12: #{mlp_forward.1} parent=5 // pred_fallthru
        _
      %p160 = scmp.lt.s32.totalorder %s11, 2
      // Predicated region
      $region25: #{mlp_forward.1} parent=5 // pred_check
        %p161 = pneg %p160
      $region26: #{mlp_forward.1} parent=5 // pred_check_branch
        %163 = sbr.rel (%p161) target = $region28
      $region27: #{mlp_forward.1} parent=5 // pred_region
        // Predicated region
        $region29: #{mlp_forward.1} parent=27 // pred_check
          %p164 = pneg %p31
        $region30: #{mlp_forward.1} parent=27 // pred_check_branch
          %166 = sbr.rel (%p164) target = $region32
        $region31: #{mlp_forward.1} parent=27 // pred_region
          %s167 = smul.u32 2, %s11
          %p168 = scmp.lt.s32.totalorder %s167, 3
          %s169 = scalar_select %p168, %s167, 3
          %s170 = smul.addr %s169, 8
          %s171 = scalar_lea.vmem %s0, %s170
          %s172 = smul.u32 2, %s11
        $region32: #{mlp_forward.1} parent=27 // pred_fallthru
          _
      $region28: #{mlp_forward.1} parent=5 // pred_fallthru
        _
      %p173 = scmp.le.s32.totalorder 1, %s11
      %p174 = scmp.lt.s32.totalorder %s11, 3
      %p175 = pnand %p173, %p174
      %p176 = pneg %p175
      // Predicated region
      $region33: #{mlp_forward.1} parent=5 // pred_check
        _
      $region34: #{mlp_forward.1} parent=5 // pred_check_branch
        %178 = sbr.rel (%p175) target = $region36
      $region35: #{mlp_forward.1} parent=5 // pred_region
        %s179 = ssub.s32 %s11, 1
        // Predicated region
        $region37: #{mlp_forward.1} parent=35 // pred_check
          %p180 = pneg %p79
        $region38: #{mlp_forward.1} parent=35 // pred_check_branch
          %182 = sbr.rel (%p180) target = $region40
        $region39: #{mlp_forward.1} parent=35 // pred_region
          %183 = dma.done [#allocation3], 2048
        $region40: #{mlp_forward.1} parent=35 // pred_fallthru
          _
        %s184 = smul.u32 2, %s16
        %p185 = scmp.lt.s32.totalorder %s184, 3
        %s186 = scalar_select %p185, %s184, 3
        %s187 = smul.addr %s186, 8
        %s188 = scalar_lea.vmem %s0, %s187
        %p189 = pneg %p37
        %p190 = pneg %p34
        %p191 = pneg %p58
        %p192 = pneg %p55
        %p193 = pneg %p79
        %p194 = pneg %p76
        %p195 = pneg %p100
        %p196 = pneg %p97
        %p197 = pneg %p126
        %p198 = pneg %p123
        %s199 = smul.u32 2, %s16
        %p200 = scmp.lt.s32.totalorder %s199, 3
        %s201 = scalar_select %p200, %s199, 3
        %s202 = smul.addr %s201, 8
        %s203 = scalar_lea.vmem %s4, %s202
        %s204 = smul.u32 2, %s16
        %p205 = scmp.lt.s32.totalorder %s204, 3
        %s206 = scalar_select %p205, %s204, 3
        %s207 = smul.addr %s206, 8
        %s208 = scalar_lea.vmem %s0, %s207
        %s209 = smul.u32 2, %s16
        %s210 = smul.u32 2, %s16
        %p211 = scmp.lt.s32.totalorder %s210, 3
        %s212 = scalar_select %p211, %s210, 3
        %s213 = smul.addr %s212, 8
        %s214 = scalar_lea.vmem %s4, %s213
        %s215 = smul.u32 2, %s16
        %v216 = vld [vmem:[%s208] sm:$0xff]
        %v217 = vld [vmem:[%s208 + $0x8] sm:$0xff]
        %v218 = vld [vmem:[%s1] sm:$0xf]
        %v219 = vld [vmem:[%s1 + $0x4] sm:$0xf]
        %v220 = vunpack.c.l.bf16 %v218
        %v221 = vunpack.c.l.bf16 %v219
        %v222 = vld [vmem:[%s3] sm:$0x1]
        %v223 = vunpack.c.l.bf16 %v222
        %v224 = vlaneseq
        %v225 = vshrl.u32 %v224, 7
        %v226 = vsub.s32 0, %v225
        %v227 = vrot.slane %v223, %v226
        %vm228 = vcmask 130048
        %v230 = vsel %vm228, %v216, 0
        %v233 = vsel %vm228, %v217, 0
        %235 = vmatprep.subr.mxu0 0.0
        %236 = vmatpush1.msra.mxu0 %v220
        %237 = vmatprep.subr.mxu0 0.0
        %238 = vmatpush1.msra.mxu0 %v221
        %239 = vmatprep.subr.mxu0 0.0
        %240 = vmatpush1.msra.mxu0 0.0
        %241 = vmatprep.subr.mxu0 0.0
        %242 = vmatpush1.msra.mxu0 0.0
        %243 = vmatprep.subr.mxu0 0.0
        %244 = vmatpush1.msra.mxu0 0.0
        %245 = vmatprep.subr.mxu0 0.0
        %246 = vmatpush1.msra.mxu0 0.0
        %247 = vmatprep.subr.mxu0 0.0
        %248 = vmatpush1.msra.mxu0 0.0
        %249 = vmatprep.subr.mxu0 0.0
        %250 = vmatpush1.msra.mxu0 0.0
        %251 = vmatprep.subr.mxu0 0.0
        %252 = vmatpush1.msra.mxu0 0.0
        %253 = vmatprep.subr.mxu0 0.0
        %254 = vmatpush1.msra.mxu0 0.0
        %255 = vmatprep.subr.mxu0 0.0
        %256 = vmatpush1.msra.mxu0 0.0
        %257 = vmatprep.subr.mxu0 0.0
        %258 = vmatpush1.msra.mxu0 0.0
        %259 = vmatprep.subr.mxu0 0.0
        %260 = vmatpush1.msra.mxu0 0.0
        %261 = vmatprep.subr.mxu0 0.0
        %262 = vmatpush1.msra.mxu0 0.0
        %263 = vmatprep.subr.mxu0 0.0
        %264 = vmatpush1.msra.mxu0 0.0
        %265 = vmatprep.subr.mxu0 0.0
        %266 = vmatpush1.msra.mxu0 0.0
        %267 = vmatprep.subr.mxu0 0.0
        %268 = vmatpush1.msra.mxu0 0.0
        %269 = vmatprep.subr.mxu0 0.0
        %270 = vmatpush1.msra.mxu0 0.0
        %271 = vmatprep.subr.mxu0 0.0
        %272 = vmatpush1.msra.mxu0 0.0
        %273 = vmatprep.subr.mxu0 0.0
        %274 = vmatpush1.msra.mxu0 0.0
        %275 = vmatprep.subr.mxu0 0.0
        %276 = vmatpush1.msra.mxu0 0.0
        %277 = vmatprep.subr.mxu0 0.0
        %278 = vmatpush1.msra.mxu0 0.0
        %279 = vmatprep.subr.mxu0 0.0
        %280 = vmatpush1.msra.mxu0 0.0
        %281 = vmatprep.subr.mxu0 0.0
        %282 = vmatpush1.msra.mxu0 0.0
        %283 = vmatprep.subr.mxu0 0.0
        %284 = vmatpush1.msra.mxu0 0.0
        %285 = vmatprep.subr.mxu0 0.0
        %286 = vmatpush1.msra.mxu0 0.0
        %287 = vmatprep.subr.mxu0 0.0
        %288 = vmatpush1.msra.mxu0 0.0
        %289 = vmatprep.subr.mxu0 0.0
        %290 = vmatpush1.msra.mxu0 0.0
        %291 = vmatprep.subr.mxu0 0.0
        %292 = vmatpush1.msra.mxu0 0.0
        %293 = vmatprep.subr.mxu0 0.0
        %294 = vmatpush1.msra.mxu0 0.0
        %295 = vmatprep.subr.mxu0 0.0
        %296 = vmatpush1.msra.mxu0 0.0
        %297 = vmatprep.subr.mxu0 0.0
        %298 = vmatpush1.msra.mxu0 0.0
        %299 = vmatprep.mubr.f32.mxu0 0.0
        %300 = vmatmul.mubr.f32.gmra.mrb[0].mxu0 %v230
        %v301 = vpop.f32.mrb[0].mxu0
        %v302 = vadd.f32 %v227, %v301
        %v303 = vpop.f32.mrb[0].mxu0
        %304 = vmatprep.mubr.f32.mxu0 0.0
        %305 = vmatmul.mubr.f32.gmra.mrb[0].mxu0 %v233
        %v306 = vpop.f32.mrb[0].mxu0
        %v307 = vadd.f32 %v227, %v306
        %v308 = vpop.f32.mrb[0].mxu0
        %309 = vdwg.mxu0
        %v310 = vmul.f32 %v302, %v302
        %v311 = vmul.f32 %v307, %v307
        %v312 = vmul.f32 %v302, %v310
        %v313 = vmul.f32 %v307, %v311
        %v314 = vmul.f32 %v312, 0.044715
        %v315 = vmul.f32 %v313, 0.044715
        %v316 = vadd.f32 %v302, %v314
        %v317 = vadd.f32 %v307, %v315
        %v318 = vmul.f32 %v316, 0.7978846
        %v319 = vmul.f32 %v317, 0.7978846
        %v320 = vtanh.pop %v318
        %v321 = vtanh.pop %v319
        %v322 = vadd.f32 %v320, 1.0
        %v323 = vadd.f32 %v321, 1.0
        %v324 = vmul.f32 %v322, 0.5
        %v325 = vmul.f32 %v323, 0.5
        %v326 = vmul.f32 %v302, %v324
        %v327 = vmul.f32 %v307, %v325
        %v328 = vld [vmem:[#allocation2] sm:$0xf]
        %v329 = vld [vmem:[#allocation2 + $0x4] sm:$0xf]
        %v330 = vld [vmem:[#allocation2 + $0x8] sm:$0xf]
        %v331 = vld [vmem:[#allocation2 + $0xc] sm:$0xf]
        %v332 = vld [vmem:[#allocation2 + $0x10] sm:$0xf]
        %v333 = vld [vmem:[#allocation2 + $0x14] sm:$0xf]
        %v334 = vld [vmem:[#allocation2 + $0x18] sm:$0xf]
        %v335 = vld [vmem:[#allocation2 + $0x1c] sm:$0xf]
        %v336 = vld [vmem:[#allocation2 + $0x20] sm:$0xf]
        %v337 = vld [vmem:[#allocation2 + $0x24] sm:$0xf]
        %v338 = vld [vmem:[#allocation2 + $0x28] sm:$0xf]
        %v339 = vld [vmem:[#allocation2 + $0x2c] sm:$0xf]
        %v340 = vld [vmem:[#allocation2 + $0x30] sm:$0xf]
        %v341 = vld [vmem:[#allocation2 + $0x34] sm:$0xf]
        %v342 = vld [vmem:[#allocation2 + $0x38] sm:$0xf]
        %v343 = vld [vmem:[#allocation2 + $0x3c] sm:$0xf]
        %v344 = vunpack.c.l.bf16 %v328
        %v345 = vunpack.c.l.bf16 %v329
        %v346 = vunpack.c.l.bf16 %v330
        %v347 = vunpack.c.l.bf16 %v331
        %v348 = vunpack.c.l.bf16 %v332
        %v349 = vunpack.c.l.bf16 %v333
        %v350 = vunpack.c.l.bf16 %v334
        %v351 = vunpack.c.l.bf16 %v335
        %v352 = vunpack.c.l.bf16 %v336
        %v353 = vunpack.c.l.bf16 %v337
        %v354 = vunpack.c.l.bf16 %v338
        %v355 = vunpack.c.l.bf16 %v339
        %v356 = vunpack.c.l.bf16 %v340
        %v357 = vunpack.c.l.bf16 %v341
        %v358 = vunpack.c.l.bf16 %v342
        %v359 = vunpack.c.l.bf16 %v343
        %s360 = scalar_lea.vmem %s3, 1
        %v361 = vld [vmem:[%s360] sm:$0x1]
        %v362 = vunpack.c.l.bf16 %v361
        %v363 = vlaneseq
        %v364 = vshrl.u32 %v363, 7
        %v365 = vsub.s32 0, %v364
        %v366 = vrot.slane %v362, %v365
        %367 = vmatprep.subr.mxu0 0.0
        %368 = vmatpush1.msra.mxu0 %v344
        %369 = vmatprep.subr.mxu0 0.0
        %370 = vmatpush1.msra.mxu0 %v345
        %371 = vmatprep.subr.mxu0 0.0
        %372 = vmatpush1.msra.mxu0 %v346
        %373 = vmatprep.subr.mxu0 0.0
        %374 = vmatpush1.msra.mxu0 %v347
        %375 = vmatprep.subr.mxu0 0.0
        %376 = vmatpush1.msra.mxu0 %v348
        %377 = vmatprep.subr.mxu0 0.0
        %378 = vmatpush1.msra.mxu0 %v349
        %379 = vmatprep.subr.mxu0 0.0
        %380 = vmatpush1.msra.mxu0 %v350
        %381 = vmatprep.subr.mxu0 0.0
        %382 = vmatpush1.msra.mxu0 %v351
        %383 = vmatprep.subr.mxu0 0.0
        %384 = vmatpush1.msra.mxu0 %v352
        %385 = vmatprep.subr.mxu0 0.0
        %386 = vmatpush1.msra.mxu0 %v353
        %387 = vmatprep.subr.mxu0 0.0
        %388 = vmatpush1.msra.mxu0 %v354
        %389 = vmatprep.subr.mxu0 0.0
        %390 = vmatpush1.msra.mxu0 %v355
        %391 = vmatprep.subr.mxu0 0.0
        %392 = vmatpush1.msra.mxu0 %v356
        %393 = vmatprep.subr.mxu0 0.0
        %394 = vmatpush1.msra.mxu0 %v357
        %395 = vmatprep.subr.mxu0 0.0
        %396 = vmatpush1.msra.mxu0 %v358
        %397 = vmatprep.subr.mxu0 0.0
        %398 = vmatpush1.msra.mxu0 %v359
        %399 = vmatprep.subr.mxu0 0.0
        %400 = vmatpush1.msra.mxu0 0.0
        %401 = vmatprep.subr.mxu0 0.0
        %402 = vmatpush1.msra.mxu0 0.0
        %403 = vmatprep.subr.mxu0 0.0
        %404 = vmatpush1.msra.mxu0 0.0
        %405 = vmatprep.subr.mxu0 0.0
        %406 = vmatpush1.msra.mxu0 0.0
        %407 = vmatprep.subr.mxu0 0.0
        %408 = vmatpush1.msra.mxu0 0.0
        %409 = vmatprep.subr.mxu0 0.0
        %410 = vmatpush1.msra.mxu0 0.0
        %411 = vmatprep.subr.mxu0 0.0
        %412 = vmatpush1.msra.mxu0 0.0
        %413 = vmatprep.subr.mxu0 0.0
        %414 = vmatpush1.msra.mxu0 0.0
        %415 = vmatprep.subr.mxu0 0.0
        %416 = vmatpush1.msra.mxu0 0.0
        %417 = vmatprep.subr.mxu0 0.0
        %418 = vmatpush1.msra.mxu0 0.0
        %419 = vmatprep.subr.mxu0 0.0
        %420 = vmatpush1.msra.mxu0 0.0
        %421 = vmatprep.subr.mxu0 0.0
        %422 = vmatpush1.msra.mxu0 0.0
        %423 = vmatprep.subr.mxu0 0.0
        %424 = vmatpush1.msra.mxu0 0.0
        %425 = vmatprep.subr.mxu0 0.0
        %426 = vmatpush1.msra.mxu0 0.0
        %427 = vmatprep.subr.mxu0 0.0
        %428 = vmatpush1.msra.mxu0 0.0
        %429 = vmatprep.subr.mxu0 0.0
        %430 = vmatpush1.msra.mxu0 0.0
        %431 = vmatprep.mubr.f32.mxu0 0.0
        %432 = vmatmul.mubr.f32.gmra.mrb[0].mxu0 %v326
        %v433 = vpop.f32.mrb[0].mxu0
        %v434 = vadd.f32 %v366, %v433
        %v435 = vpop.f32.mrb[0].mxu0
        %436 = vmatprep.mubr.f32.mxu0 0.0
        %437 = vmatmul.mubr.f32.gmra.mrb[0].mxu0 %v327
        %v438 = vpop.f32.mrb[0].mxu0
        %v439 = vadd.f32 %v366, %v438
        %v440 = vpop.f32.mrb[0].mxu0
        %441 = vdwg.mxu0
        %v442 = vtanh.pop %v434
        %v443 = vtanh.pop %v439
        %s444 = scalar_lea.vmem [#allocation2], 64
        %v445 = vld [vmem:[%s444] sm:$0xf]
        %v446 = vld [vmem:[%s444 + $0x4] sm:$0xf]
        %v447 = vld [vmem:[%s444 + $0x8] sm:$0xf]
        %v448 = vld [vmem:[%s444 + $0xc] sm:$0xf]
        %v449 = vld [vmem:[%s444 + $0x10] sm:$0xf]
        %v450 = vld [vmem:[%s444 + $0x14] sm:$0xf]
        %v451 = vld [vmem:[%s444 + $0x18] sm:$0xf]
        %v452 = vld [vmem:[%s444 + $0x1c] sm:$0xf]
        %v453 = vld [vmem:[%s444 + $0x20] sm:$0xf]
        %v454 = vld [vmem:[%s444 + $0x24] sm:$0xf]
        %v455 = vld [vmem:[%s444 + $0x28] sm:$0xf]
        %v456 = vld [vmem:[%s444 + $0x2c] sm:$0xf]
        %v457 = vld [vmem:[%s444 + $0x30] sm:$0xf]
        %v458 = vld [vmem:[%s444 + $0x34] sm:$0xf]
        %v459 = vld [vmem:[%s444 + $0x38] sm:$0xf]
        %v460 = vld [vmem:[%s444 + $0x3c] sm:$0xf]
        %v461 = vunpack.c.l.bf16 %v445
        %v462 = vunpack.c.l.bf16 %v446
        %v463 = vunpack.c.l.bf16 %v447
        %v464 = vunpack.c.l.bf16 %v448
        %v465 = vunpack.c.l.bf16 %v449
        %v466 = vunpack.c.l.bf16 %v450
        %v467 = vunpack.c.l.bf16 %v451
        %v468 = vunpack.c.l.bf16 %v452
        %v469 = vunpack.c.l.bf16 %v453
        %v470 = vunpack.c.l.bf16 %v454
        %v471 = vunpack.c.l.bf16 %v455
        %v472 = vunpack.c.l.bf16 %v456
        %v473 = vunpack.c.l.bf16 %v457
        %v474 = vunpack.c.l.bf16 %v458
        %v475 = vunpack.c.l.bf16 %v459
        %v476 = vunpack.c.l.bf16 %v460
        %s477 = scalar_lea.vmem %s3, 2
        %v478 = vld [vmem:[%s477] sm:$0x1]
        %v479 = vunpack.c.l.bf16 %v478
        %v480 = vlaneseq
        %v481 = vshrl.u32 %v480, 7
        %v482 = vsub.s32 0, %v481
        %v483 = vrot.slane %v479, %v482
        %484 = vmatprep.subr.mxu0 0.0
        %485 = vmatpush1.msra.mxu0 %v461
        %486 = vmatprep.subr.mxu0 0.0
        %487 = vmatpush1.msra.mxu0 %v462
        %488 = vmatprep.subr.mxu0 0.0
        %489 = vmatpush1.msra.mxu0 %v463
        %490 = vmatprep.subr.mxu0 0.0
        %491 = vmatpush1.msra.mxu0 %v464
        %492 = vmatprep.subr.mxu0 0.0
        %493 = vmatpush1.msra.mxu0 %v465
        %494 = vmatprep.subr.mxu0 0.0
        %495 = vmatpush1.msra.mxu0 %v466
        %496 = vmatprep.subr.mxu0 0.0
        %497 = vmatpush1.msra.mxu0 %v467
        %498 = vmatprep.subr.mxu0 0.0
        %499 = vmatpush1.msra.mxu0 %v468
        %500 = vmatprep.subr.mxu0 0.0
        %501 = vmatpush1.msra.mxu0 %v469
        %502 = vmatprep.subr.mxu0 0.0
        %503 = vmatpush1.msra.mxu0 %v470
        %504 = vmatprep.subr.mxu0 0.0
        %505 = vmatpush1.msra.mxu0 %v471
        %506 = vmatprep.subr.mxu0 0.0
        %507 = vmatpush1.msra.mxu0 %v472
        %508 = vmatprep.subr.mxu0 0.0
        %509 = vmatpush1.msra.mxu0 %v473
        %510 = vmatprep.subr.mxu0 0.0
        %511 = vmatpush1.msra.mxu0 %v474
        %512 = vmatprep.subr.mxu0 0.0
        %513 = vmatpush1.msra.mxu0 %v475
        %514 = vmatprep.subr.mxu0 0.0
        %515 = vmatpush1.msra.mxu0 %v476
        %516 = vmatprep.subr.mxu0 0.0
        %517 = vmatpush1.msra.mxu0 0.0
        %518 = vmatprep.subr.mxu0 0.0
        %519 = vmatpush1.msra.mxu0 0.0
        %520 = vmatprep.subr.mxu0 0.0
        %521 = vmatpush1.msra.mxu0 0.0
        %522 = vmatprep.subr.mxu0 0.0
        %523 = vmatpush1.msra.mxu0 0.0
        %524 = vmatprep.subr.mxu0 0.0
        %525 = vmatpush1.msra.mxu0 0.0
        %526 = vmatprep.subr.mxu0 0.0
        %527 = vmatpush1.msra.mxu0 0.0
        %528 = vmatprep.subr.mxu0 0.0
        %529 = vmatpush1.msra.mxu0 0.0
        %530 = vmatprep.subr.mxu0 0.0
        %531 = vmatpush1.msra.mxu0 0.0
        %532 = vmatprep.subr.mxu0 0.0
        %533 = vmatpush1.msra.mxu0 0.0
        %534 = vmatprep.subr.mxu0 0.0
        %535 = vmatpush1.msra.mxu0 0.0
        %536 = vmatprep.subr.mxu0 0.0
        %537 = vmatpush1.msra.mxu0 0.0
        %538 = vmatprep.subr.mxu0 0.0
        %539 = vmatpush1.msra.mxu0 0.0
        %540 = vmatprep.subr.mxu0 0.0
        %541 = vmatpush1.msra.mxu0 0.0
        %542 = vmatprep.subr.mxu0 0.0
        %543 = vmatpush1.msra.mxu0 0.0
        %544 = vmatprep.subr.mxu0 0.0
        %545 = vmatpush1.msra.mxu0 0.0
        %546 = vmatprep.subr.mxu0 0.0
        %547 = vmatpush1.msra.mxu0 0.0
        %548 = vmatprep.mubr.f32.mxu0 0.0
        %549 = vmatmul.mubr.f32.gmra.mrb[0].mxu0 %v442
        %v550 = vpop.f32.mrb[0].mxu0
        %v551 = vadd.f32 %v483, %v550
        %v552 = vpop.f32.mrb[0].mxu0
        %553 = vmatprep.mubr.f32.mxu0 0.0
        %554 = vmatmul.mubr.f32.gmra.mrb[0].mxu0 %v443
        %v555 = vpop.f32.mrb[0].mxu0
        %v556 = vadd.f32 %v483, %v555
        %v557 = vpop.f32.mrb[0].mxu0
        %558 = vdwg.mxu0
        %v559 = vtanh.pop %v551
        %v560 = vtanh.pop %v556
        %561 = vst [vmem:[%s214] sm:$0xff] %v559
        %562 = vst [vmem:[%s214 + $0x8] sm:$0xff] %v560
        %s563 = smul.u32 2, %s16
        %p564 = scmp.lt.s32.totalorder %s563, 3
        %s565 = scalar_select %p564, %s563, 3
        %s566 = smul.addr %s565, 8
        %s567 = scalar_lea.vmem %s4, %s566
        // Predicated region
        $region41: #{mlp_forward.1} parent=35 // pred_check
          %p568 = pneg %p123
        $region42: #{mlp_forward.1} parent=35 // pred_check_branch
          %570 = sbr.rel (%p568) target = $region44
        $region43: #{mlp_forward.1} parent=35 // pred_region
          %s571 = smul.u32 2, %s16
        $region44: #{mlp_forward.1} parent=35 // pred_fallthru
          _
      $region36: #{mlp_forward.1} parent=5 // pred_fallthru
        _
      %p572 = scmp.le.s32.totalorder 2, %s11
      // Predicated region
      $region45: #{mlp_forward.1} parent=5 // pred_check
        %p573 = pneg %p572
      $region46: #{mlp_forward.1} parent=5 // pred_check_branch
        %575 = sbr.rel (%p573) target = $region48
      $region47: #{mlp_forward.1} parent=5 // pred_region
        %s576 = ssub.s32 %s11, 2
        // Predicated region
        $region49: #{mlp_forward.1} parent=47 // pred_check
          %p577 = pneg %p129
        $region50: #{mlp_forward.1} parent=47 // pred_check_branch
          %579 = sbr.rel (%p577) target = $region52
        $region51: #{mlp_forward.1} parent=47 // pred_region
          %s580 = smul.u32 2, %s17
          %p581 = scmp.lt.s32.totalorder %s580, 3
          %s582 = scalar_select %p581, %s580, 3
          %s583 = smul.addr %s582, 8
          %s584 = scalar_lea.vmem %s4, %s583
        $region52: #{mlp_forward.1} parent=47 // pred_fallthru
          _
      $region48: #{mlp_forward.1} parent=5 // pred_fallthru
        _
    $region6: #{mlp_forward.1} parent=1 // loop_footer
      %s15 = sadd.s32 1, %s11
    $region7: #{mlp_forward.1} parent=1 // loop_footer_branch
      %10 = sbr.rel target = $region3
    $region8: #{mlp_forward.1} parent=1 // loop_exit
      _
    %585 = vsyncpa [#allocation3], 1
    %s586 = scalar_lea.sflag [#allocation3], 1
    %587 = vsyncpa %s586, 1

</llo_original>
